<compile_context>
chip_gen: v7x
topology: tpu7x:2x2x1
jax: 0.10.0
libtpu: 0.0.40
codegen_flags: <defaults>
</compile_context>

<pallas_src>
import jax
import jax.numpy as jnp
from jax.experimental import pallas as pl
from jax.experimental.pallas import tpu as pltpu

_LANE = 128
_WIDE_ROW_BYTES = 64 * 1024  # class-tile when a single padded row exceeds this


def _vmem_capacity_bytes():
    try:
        return int(pltpu.get_tpu_info().vmem_capacity_bytes)
    except Exception:
        return 64 * 1024 * 1024  # conservative: v7x has the smallest VMEM


def _pick_tiles(n, c, itemsize, budget_bytes, has_weight):
    """Choose (tile_n, tile_c) so the double-buffered resident footprint
    (logits + per-row side inputs + scratch, all lane-padded to 128) stays
    within budget_bytes."""
    align = max(8, 32 // itemsize)              # sublane packing: 8 f32 / 16 bf16 / 32 int8
    c_pad = ((c + _LANE - 1) // _LANE) * _LANE
    # targets (+ w_t) are (tile_n, 1) blocks -> lane-padded to 128 in VMEM, double-buffered
    side_per_row = 2 * _LANE * 4 * (2 if has_weight else 1)

    if c_pad * itemsize > _WIDE_ROW_BYTES and c > 512:
        # Wide rows: tile the class dimension (online LSE), keep tile_n large.
        tile_n = n if n < 512 else 512
        scratch_per_row = 3 * _LANE * 4         # m, l, y_t VMEM scratch
        avail = budget_bytes - tile_n * (side_per_row + scratch_per_row)
        tile_c = (avail // max(1, 2 * tile_n * itemsize)) // _LANE * _LANE
        if _LANE <= tile_c < c:
            return int(tile_n), int(tile_c)

    # Single class tile spanning all of C.
    per_row = 2 * c_pad * itemsize + side_per_row
    t = budget_bytes // max(1, per_row)
    t = max(align, (t // align) * align)
    tile_n = n if n <= t else int(t)
    return int(tile_n), int(c)


def _make_ce_kernel(n_rows, n_cols, tile_n, tile_c, n_cls_tiles, has_weight):
    needs_row_mask = (n_rows % tile_n) != 0
    needs_col_mask = (n_cols % tile_c) != 0
    multi_c = n_cls_tiles > 1

    def _emit_partial(lse_like, y_t_like, wt_ref, out_ref):
        # per_loss = lse - y_t  (both terms may share a common offset that cancels)
        per_loss = lse_like - y_t_like
        if has_weight:
            per_loss = per_loss * wt_ref[...].astype(jnp.float32)
        if needs_row_mask:
            row = pl.program_id(0) * tile_n + jax.lax.broadcasted_iota(
                jnp.int32, per_loss.shape, 0)
            per_loss = jnp.where(row < n_rows, per_loss, 0.0)   # select: safe vs NaN padding
        # one XLU cross-sublane reduce + one scalar SMEM store per row tile
        out_ref[0, 0] = jnp.sum(per_loss)

    if not multi_c:
        # ---------- single class tile: whole row resident, no scratch ----------
        def kernel(*refs):
            if has_weight:
                logits_ref, targets_ref, wt_ref, out_ref = refs
            else:
                logits_ref, targets_ref, out_ref = refs
                wt_ref = None
            y = logits_ref[...].astype(jnp.float32)        # (tile_n, C)
            t = targets_ref[...]                           # (tile_n, 1) int32
            m = jnp.max(y, axis=-1, keepdims=True)
            ymm = y - m
            l = jnp.sum(jnp.exp(ymm), axis=-1, keepdims=True)
            col = jax.lax.broadcasted_iota(jnp.int32, y.shape, 1)
            y_t_mm = jnp.sum(jnp.where(col == t, ymm, 0.0), axis=-1, keepdims=True)
            # (lse - m) - (y_t - m) == lse - y_t
            _emit_partial(jnp.log(l), y_t_mm, wt_ref, out_ref)

        return kernel

    # ---------- class-tiled path: online logsumexp across class tiles ----------
    def kernel(*refs):
        if has_weight:
            logits_ref, targets_ref, wt_ref, out_ref, m_ref, l_ref, yt_ref = refs
        else:
            logits_ref, targets_ref, out_ref, m_ref, l_ref, yt_ref = refs
            wt_ref = None
        j = pl.program_id(1)

        @pl.when(j == 0)
        def _():
            m_ref[...] = jnp.full_like(m_ref, -1e30)   # finite "-inf": no NaN in rescale
            l_ref[...] = jnp.zeros_like(l_ref)
            yt_ref[...] = jnp.zeros_like(yt_ref)

        y = logits_ref[...].astype(jnp.float32)            # (tile_n, tile_c)
        t = targets_ref[...]                               # (tile_n, 1) int32
        col = j * tile_c + jax.lax.broadcasted_iota(jnp.int32, y.shape, 1)
        if needs_col_mask:
            y = jnp.where(col < n_cols, y, -1e30)          # mask padded class columns

        m_prev = m_ref[...]
        m_new = jnp.maximum(m_prev, jnp.max(y, axis=-1, keepdims=True))
        l_ref[...] = l_ref[...] * jnp.exp(m_prev - m_new) + jnp.sum(
            jnp.exp(y - m_new), axis=-1, keepdims=True)
        m_ref[...] = m_new
        # target logit lives in exactly one class tile; accumulate the select
        yt_ref[...] += jnp.sum(jnp.where(col == t, y, 0.0), axis=-1, keepdims=True)

        @pl.when(j == n_cls_tiles - 1)
        def _():
            lse = m_ref[...] + jnp.log(l_ref[...])
            _emit_partial(lse, yt_ref[...], wt_ref, out_ref)

    return kernel


def cross_entropy_loss(outputs, targets, weight=None, tile_n=None, tile_c=None):
    """outputs: (N, C) float logits (f32 or bf16); targets: (N,) int class ids;
    weight: optional (C,) per-class weights.  Returns scalar f32 mean loss.
    NOTE: out-of-range targets are not checked (PyTorch would raise); they
    silently contribute logsumexp(row) to the loss."""
    outputs = jnp.asarray(outputs)
    N, C = outputs.shape
    targets = jnp.asarray(targets).astype(jnp.int32).reshape(-1)
    targets2d = targets.reshape(N, 1)
    has_weight = weight is not None
    itemsize = outputs.dtype.itemsize

    vmem_cap = _vmem_capacity_bytes()
    # v5e/v6e (128 MiB physical) -> 96 MiB limit; v7x (64 MiB physical) -> 48 MiB
    vmem_limit = int(min((vmem_cap * 3) // 4, 96 * 1024 * 1024))
    budget = (vmem_limit * 2) // 3                 # headroom for out staging / internals

    auto_tn, auto_tc = _pick_tiles(N, C, itemsize, budget, has_weight)
    tile_n = min(N, tile_n if tile_n is not None else auto_tn)
    tile_c = min(C, tile_c if tile_c is not None else auto_tc)

    n_row_tiles = pl.cdiv(N, tile_n)
    n_cls_tiles = pl.cdiv(C, tile_c)

    in_specs = [
        pl.BlockSpec((tile_n, tile_c), lambda i, j: (i, j)),   # logits slab (VMEM, 2-buffered)
        pl.BlockSpec((tile_n, 1), lambda i, j: (i, 0)),        # targets
    ]
    args = [outputs, targets2d]
    if has_weight:
        # per-sample class-weight gather hoisted out of the kernel (tiny (C,) table)
        w_t = jnp.asarray(weight, jnp.float32).reshape(-1)[targets].reshape(N, 1)
        in_specs.append(pl.BlockSpec((tile_n, 1), lambda i, j: (i, 0)))
        args.append(w_t)

    scratch_shapes = (
        [pltpu.VMEM((tile_n, 1), jnp.float32)] * 3 if n_cls_tiles > 1 else []
    )

    bytes_accessed = N * C * itemsize + N * 4 * (2 if has_weight else 1) + n_row_tiles * 4

    partials = pl.pallas_call(
        _make_ce_kernel(N, C, tile_n, tile_c, n_cls_tiles, has_weight),
        out_shape=jax.ShapeDtypeStruct((n_row_tiles, 1), jnp.float32),
        grid=(n_row_tiles, n_cls_tiles),
        in_specs=in_specs,
        # tiny per-row-tile partial sums, staged through SMEM (no (8,128) constraint)
        out_specs=pl.BlockSpec((1, 1), lambda i, j: (i, 0), memory_space=pltpu.SMEM),
        scratch_shapes=scratch_shapes,
        compiler_params=pltpu.CompilerParams(
            # row tiles are independent -> "parallel" (2 TCs on v7x); class tiles reduce
            dimension_semantics=("parallel", "arbitrary"),
            vmem_limit_bytes=vmem_limit,
        ),
        cost_estimate=pl.CostEstimate(
            flops=int(6 * N * C),
            transcendentals=int(N * C),
            bytes_accessed=int(bytes_accessed),
        ),
    )(*args)
    # pairwise f32 reduction of per-tile partials + torch.mean semantics (divide by N)
    return jnp.sum(partials) / jnp.float32(N)


if __name__ == "__main__":
    key = jax.random.PRNGKey(0)
    k1, k2, k3, k4, k5 = jax.random.split(key, 5)

    def ref_loss(outputs, targets, weight=None):
        logp = jax.nn.log_softmax(outputs.astype(jnp.float32), axis=1)
        per = -logp[jnp.arange(outputs.shape[0]), targets]
        if weight is not None:
            per = per * jnp.asarray(weight, jnp.float32).reshape(-1)[targets]
        return jnp.mean(per)

    # small shapes matching the module's (N, C) logits / (N,) targets signature
    N, C = 8, 32
    outputs = jax.random.normal(k1, (N, C), dtype=jnp.float32)
    targets = jax.random.randint(k2, (N,), 0, C, dtype=jnp.int32)
    weight = jax.random.uniform(k3, (C,), dtype=jnp.float32, minval=0.5, maxval=1.5)

    # weighted path
    loss_w = cross_entropy_loss(outputs, targets, weight)
    jax.block_until_ready(loss_w)
    assert jnp.allclose(loss_w, ref_loss(outputs, targets, weight), rtol=1e-5, atol=1e-5), loss_w

    # unweighted path (weight multiply statically removed)
    loss_u = cross_entropy_loss(outputs, targets)
    jax.block_until_ready(loss_u)
    assert jnp.allclose(loss_u, ref_loss(outputs, targets), rtol=1e-5, atol=1e-5), loss_u

    # multi-row-tile path with a partial last tile (row mask + per-tile partials)
    N2, C2 = 100, 256
    outputs2 = jax.random.normal(k4, (N2, C2), dtype=jnp.float32)
    targets2 = jax.random.randint(k5, (N2,), 0, C2, dtype=jnp.int32)
    loss2 = cross_entropy_loss(outputs2, targets2, tile_n=32)
    jax.block_until_ready(loss2)
    assert jnp.allclose(loss2, ref_loss(outputs2, targets2), rtol=1e-5, atol=1e-5), loss2

    # class-tiled online-LSE path (forced small tiles): 2-D grid, col mask, VMEM scratch
    k6, k7, k8 = jax.random.split(k4, 3)
    N3, C3 = 64, 300
    outputs3 = jax.random.normal(k6, (N3, C3), dtype=jnp.float32)
    targets3 = jax.random.randint(k7, (N3,), 0, C3, dtype=jnp.int32)
    weight3 = jax.random.uniform(k8, (C3,), dtype=jnp.float32, minval=0.5, maxval=1.5)
    loss3w = cross_entropy_loss(outputs3, targets3, weight3, tile_n=32, tile_c=128)
    loss3u = cross_entropy_loss(outputs3, targets3, None, tile_n=32, tile_c=128)
    jax.block_until_ready(loss3w)
    jax.block_until_ready(loss3u)
    assert jnp.allclose(loss3w, ref_loss(outputs3, targets3, weight3), rtol=1e-5, atol=1e-5), loss3w
    assert jnp.allclose(loss3u, ref_loss(outputs3, targets3), rtol=1e-5, atol=1e-5), loss3u

    # bf16 logits accepted directly (no wrapper f32 HBM copy)
    loss_b = cross_entropy_loss(outputs.astype(jnp.bfloat16), targets, weight)
    jax.block_until_ready(loss_b)
    ref_b = ref_loss(outputs.astype(jnp.bfloat16), targets, weight)
    assert jnp.allclose(loss_b, ref_b, rtol=1e-4, atol=1e-4), (loss_b, ref_b)

    print("KERNEL_OK")
</pallas_src>

<mosaic_0001>
module attributes {stable_mosaic.version = 11 : i64} {
  func.func @kernel(%arg0: i32, %arg1: i32, %arg2: memref<8x32xf32, #tpu.memory_space<vmem>>, %arg3: memref<8x1xi32, #tpu.memory_space<vmem>>, %arg4: memref<8x1xf32, #tpu.memory_space<vmem>>, %arg5: memref<1x1xf32, #tpu.memory_space<smem>>) attributes {dimension_semantics = [#tpu.dimension_semantics<parallel>, #tpu.dimension_semantics<arbitrary>], iteration_bounds = array<i64: 1, 1>, scalar_prefetch = 0 : i64, scratch_operands = 0 : i64, tpu.core_type = #tpu.core_type<tc>, window_params = [{transform_indices = @transform_0, window_bounds = array<i64: 8, 32>}, {transform_indices = @transform_1, window_bounds = array<i64: 8, 1>}, {transform_indices = @transform_2, window_bounds = array<i64: 8, 1>}, {transform_indices = @transform_3, window_bounds = array<i64: 1, 1>}]} {
    %c0 = arith.constant 0 : index
    %c0_0 = arith.constant 0 : index
    %0 = vector.load %arg2[%c0, %c0_0] : memref<8x32xf32, #tpu.memory_space<vmem>>, vector<8x32xf32>
    %c0_1 = arith.constant 0 : index
    %c0_2 = arith.constant 0 : index
    %1 = vector.load %arg3[%c0_1, %c0_2] : memref<8x1xi32, #tpu.memory_space<vmem>>, vector<8x1xi32>
    %cst = arith.constant dense<0xFF800000> : vector<8xf32>
    %2 = vector.multi_reduction <maximumf>, %0, %cst [1] : vector<8x32xf32> to vector<8xf32>
    %3 = vector.shape_cast %2 : vector<8xf32> to vector<8x1xf32>
    %4 = vector.broadcast %3 : vector<8x1xf32> to vector<8x32xf32>
    %5 = arith.subf %0, %4 : vector<8x32xf32>
    %6 = math.exp %5 : vector<8x32xf32>
    %cst_3 = arith.constant dense<0.000000e+00> : vector<8xf32>
    %7 = vector.multi_reduction <add>, %6, %cst_3 [1] : vector<8x32xf32> to vector<8xf32>
    %8 = vector.shape_cast %7 : vector<8xf32> to vector<8x1xf32>
    %9 = tpu.iota {dimensions = array<i32: 1>} : vector<8x32xi32>
    %10 = vector.broadcast %1 : vector<8x1xi32> to vector<8x32xi32>
    %11 = arith.cmpi eq, %9, %10 : vector<8x32xi32>
    %cst_4 = arith.constant 0.000000e+00 : f32
    %12 = vector.broadcast %cst_4 : f32 to vector<8x32xf32>
    %13 = arith.select %11, %5, %12 : vector<8x32xi1>, vector<8x32xf32>
    %cst_5 = arith.constant dense<0.000000e+00> : vector<8xf32>
    %14 = vector.multi_reduction <add>, %13, %cst_5 [1] : vector<8x32xf32> to vector<8xf32>
    %15 = vector.shape_cast %14 : vector<8xf32> to vector<8x1xf32>
    %16 = math.log %8 : vector<8x1xf32>
    %17 = arith.subf %16, %15 : vector<8x1xf32>
    %c0_6 = arith.constant 0 : index
    %c0_7 = arith.constant 0 : index
    %18 = vector.load %arg4[%c0_6, %c0_7] : memref<8x1xf32, #tpu.memory_space<vmem>>, vector<8x1xf32>
    %19 = arith.mulf %17, %18 : vector<8x1xf32>
    %20 = vector.shape_cast %19 : vector<8x1xf32> to vector<1x8x1xf32>
    %cst_8 = arith.constant dense<0.000000e+00> : vector<1xf32>
    %21 = vector.multi_reduction <add>, %20, %cst_8 [1, 2] : vector<1x8x1xf32> to vector<1xf32>
    %22 = vector.shape_cast %21 : vector<1xf32> to vector<1x1x1xf32>
    %23 = vector.extract %22[0, 0, 0] : f32 from vector<1x1x1xf32>
    %c0_9 = arith.constant 0 : index
    %c0_10 = arith.constant 0 : index
    %24 = memref.load %arg5[%c0_9, %c0_10] : memref<1x1xf32, #tpu.memory_space<smem>>
    memref.store %23, %arg5[%c0_9, %c0_10] : memref<1x1xf32, #tpu.memory_space<smem>>
    return
  }
  func.func @transform_0(%arg0: i32, %arg1: i32) -> (i32, i32) {
    %c0_i32 = arith.constant 0 : i32
    return %arg0, %arg1 : i32, i32
  }
  func.func @transform_1(%arg0: i32, %arg1: i32) -> (i32, i32) {
    %c0_i32 = arith.constant 0 : i32
    %c0_i32_0 = arith.constant 0 : i32
    return %arg0, %c0_i32 : i32, i32
  }
  func.func @transform_2(%arg0: i32, %arg1: i32) -> (i32, i32) {
    %c0_i32 = arith.constant 0 : i32
    %c0_i32_0 = arith.constant 0 : i32
    return %arg0, %c0_i32 : i32, i32
  }
  func.func @transform_3(%arg0: i32, %arg1: i32) -> (i32, i32) {
    %c0_i32 = arith.constant 0 : i32
    %c0_i32_0 = arith.constant 0 : i32
    return %arg0, %c0_i32 : i32, i32
  }
}

</mosaic_0001>

<llo_original>
// kernel: tpu_custom_call.1
$region0: #{tpu_custom_call.1}
  #allocation0 [shape = 'u32[]', space=smem, size = 0x4, offset = 0x4, fixed_abs, tag = 'smem constant byte address 0x4 - core index']
  #allocation1 [shape = 'u32[144,128]{1,0:T(1,128)}', space=vmem, size = 0x12000, scoped, tag = 'internal scratch']
  %s0 = inlined_call_operand.vmem [shape: f32[8,32], index: 0, kind: input, shape index: {}]
  %s1 = inlined_call_operand.vmem [shape: s32[8,1], index: 1, kind: input, shape index: {}]
  %s2 = inlined_call_operand.vmem [shape: f32[8,1], index: 2, kind: input, shape index: {}]
  %s3 = inlined_call_operand.hbm [shape: f32[1,1], index: 3, kind: output, shape index: {}]
  %s4 = sld [smem:[#allocation0]]
  $region22: #{tpu_custom_call.1} parent=0
    _
  %s6 = ssub.s32 1, %s4
  %s7 = scalar_select 0, %s6, %s4
  $region1: #{tpu_custom_call.1} parent=0
    #allocation2 [shape = 'u8[512]{0}', space=smem, size = 0x200, scoped, tag = 'output window, operand 0, single buffered']
    #allocation3 [shape = 's32[1]{0}', space=sflag, size = 0x4, scoped, tag = 'scoped memory for tpu_custom_call.1']
    %8 = vsyncpa [#allocation3], 0
    // Predicated region
    $region2: #{tpu_custom_call.1} parent=1 // pred_check
      _
    $region3: #{tpu_custom_call.1} parent=1 // pred_check_branch
      %10 = sbr.rel (0) target = $region5
    $region4: #{tpu_custom_call.1} parent=1 // pred_region
      _
    $region5: #{tpu_custom_call.1} parent=1 // pred_fallthru
      _
    // Predicated region
    $region6: #{tpu_custom_call.1} parent=1 // pred_check
      _
    $region7: #{tpu_custom_call.1} parent=1 // pred_check_branch
      %12 = sbr.rel (0) target = $region9
    $region8: #{tpu_custom_call.1} parent=1 // pred_region
      _
    $region9: #{tpu_custom_call.1} parent=1 // pred_fallthru
      _
    // Predicated region
    $region10: #{tpu_custom_call.1} parent=1 // pred_check
      _
    $region11: #{tpu_custom_call.1} parent=1 // pred_check_branch
      %14 = sbr.rel (0) target = $region13
    $region12: #{tpu_custom_call.1} parent=1 // pred_region
      _
    $region13: #{tpu_custom_call.1} parent=1 // pred_fallthru
      _
    %v15 = vld [vmem:[%s0] sm:$0xff]
    %v16 = vld [vmem:[%s1] sm:$0xff]
    %vm17 = vcmask 261120
    %v18 = vsel %vm17, %v15, -inf
    %19 = vmax.xlane.f32.xlu0 %v18
    %v20 = vpop.xlane.xlu0 %19
    %v21 = vsub.f32 %v15, %v20
    %v22 = vmul.f32 %v21, 1.442695
    %v23 = vpow.pop %v22
    %v24 = vsel %vm17, %v23, 0.0
    %25 = vadd.xlane.f32.xlu0 %v24
    %v26 = vpop.xlane.xlu0 %25
    %v27 = vlaneseq
    %v28 = vand.u32 %v27, 127
    %29 = vset.pattern.permute.xlu0 0
    %30 = vperm.xlu0 %29, %v16
    %v31 = vpop.permute.xlu0 %30
    %vm32 = vcmp.eq.s32.totalorder %v28, %v31
    %v33 = vsel %vm32, %v21, 0.0
    %v34 = vsel %vm17, %v33, 0.0
    %35 = vadd.xlane.f32.xlu0 %v34
    %v36 = vpop.xlane.xlu0 %35
    %v37 = vlog2.pop %v26
    %v38 = vmul.f32 %v37, 0.6931472
    %v39 = vsub.f32 %v38, %v36
    %v40 = vld [vmem:[%s2] sm:$0xff]
    %v41 = vmul.f32 %v39, %v40
    %vm42 = vcmask 7168
    %v43 = vsel %vm42, %v41, 0.0
    %44 = vadd.xlane.f32.xlu0 %v43
    %v45 = vpop.xlane.xlu0 %44
    %v46 = vrot.slane %v45, 4
    %v47 = vadd.f32 %v45, %v46
    %v48 = vrot.slane %v47, 2
    %v49 = vadd.f32 %v47, %v48
    %v50 = vrot.slane %v49, 1
    %v51 = vadd.f32 %v49, %v50
    %s52 = vtos %v51
    %s53 = scalar_lea.smem [#allocation2], 0
    %54 = sst [smem:[%s53]] %s52
    // Predicated region
    $region14: #{tpu_custom_call.1} parent=1 // pred_check
      _
    $region15: #{tpu_custom_call.1} parent=1 // pred_check_branch
      %56 = sbr.rel (0) target = $region17
    $region16: #{tpu_custom_call.1} parent=1 // pred_region
      %s58 = ssub.s32 16, 16
      %59 = vsyncadd [#allocation3], %s58
      %62 = dma.smem_to_hbm [#allocation2], 16, %s3, [#allocation3]
    $region17: #{tpu_custom_call.1} parent=1 // pred_fallthru
      _
    // Predicated region
    $region18: #{tpu_custom_call.1} parent=1 // pred_check
      _
    $region19: #{tpu_custom_call.1} parent=1 // pred_check_branch
      %64 = sbr.rel (0) target = $region21
    $region20: #{tpu_custom_call.1} parent=1 // pred_region
      %65 = dma.done [#allocation3], 16
    $region21: #{tpu_custom_call.1} parent=1 // pred_fallthru
      _
    %66 = sfence
    %67 = vsyncpa [#allocation3], 1

</llo_original>
